<compile_context>
chip_gen: v7x
topology: tpu7x:2x2x1
jax: 0.10.0
libtpu: 0.0.40
codegen_flags: <defaults>
</compile_context>

<pallas_src>
import jax
import jax.numpy as jnp
from jax.experimental import pallas as pl
from jax.experimental.pallas import tpu as pltpu


def _conv1x1_kernel(x_ref, w_ref, b_ref, o_ref):
    # x_ref: [C, TM] f32, w_ref: [Cout, C] bf16, b_ref: [Cout, 1] f32,
    # o_ref: [Cout, TM] bf16.
    x = x_ref[...].astype(w_ref.dtype)                     # f32 -> bf16 in VMEM (VPU)
    acc = jnp.dot(w_ref[...], x, preferred_element_type=jnp.float32)
    o_ref[...] = (acc + b_ref[...]).astype(o_ref.dtype)    # f32 bias add, bf16 store


def _round_up(a, b):
    return ((a + b - 1) // b) * b


def _pick_tiling(B, C, Cout, M, x_bytes, out_bytes):
    """Pick the spatial tile TM and a VMEM limit from a byte budget."""
    try:
        # 64 MiB/TC on v7x, 128 MiB on v5e/v6e.
        cap = pltpu.get_tpu_info().vmem_capacity_bytes
    except Exception:
        cap = 64 * 1024 * 1024
    vmem_limit = int(min(cap // 2, 64 * 1024 * 1024))       # ~32 MiB v7x, 64 MiB v5e/v6e

    resident = Cout * C * 2 + Cout * 4                       # bf16 weight + f32 bias
    headroom = 4 * 1024 * 1024                               # Mosaic scratch / slack
    budget = max(vmem_limit - resident - headroom, 2 * 1024 * 1024)

    # Double-buffered bytes per spatial column: f32 x tile + bf16 out tile.
    per_col = 2 * (C * x_bytes + Cout * out_bytes)
    tm = budget // per_col

    if B == 1 and M > 128:
        # Keep >= 2 grid steps along a "parallel" axis so both v7x cores work.
        tm = min(tm, _round_up(pl.cdiv(M, 2), 128))

    if tm >= M:
        return M, vmem_limit                                 # full extent is always legal
    return max(128, (tm // 128) * 128), vmem_limit           # lane-dense multiple of 128


def conv1x1_transposed_pallas(x3, weight, bias, compute_dtype=jnp.bfloat16):
    """x3: [B, C, M], weight: [Cout, C], bias: [Cout] -> [B, Cout, M] in compute_dtype."""
    B, C, M = x3.shape
    Cout, Cin = weight.shape
    assert Cin == C

    wq = weight.astype(compute_dtype)                        # tiny; fine in the wrapper
    b_col = bias.reshape(Cout, 1).astype(jnp.float32)

    x_bytes = jnp.dtype(x3.dtype).itemsize
    out_bytes = jnp.dtype(compute_dtype).itemsize
    TM, vmem_limit = _pick_tiling(B, C, Cout, M, x_bytes, out_bytes)
    grid = (B, pl.cdiv(M, TM))

    cost = pl.CostEstimate(
        flops=2 * B * Cout * C * M,
        transcendentals=0,
        bytes_accessed=(B * C * M * x_bytes          # x read (f32)
                        + Cout * C * out_bytes       # weight (bf16)
                        + Cout * 4                   # bias (f32)
                        + B * Cout * M * out_bytes), # output write (bf16)
    )

    return pl.pallas_call(
        _conv1x1_kernel,
        out_shape=jax.ShapeDtypeStruct((B, Cout, M), compute_dtype),
        grid_spec=pltpu.PrefetchScalarGridSpec(
            num_scalar_prefetch=0,
            grid=grid,
            in_specs=[
                # x: stream spatial tiles (f32, cast in-kernel); batch squeezed.
                pl.BlockSpec((None, C, TM), lambda b, m: (b, 0, m)),
                # weight / bias: single VMEM-resident block across the grid.
                pl.BlockSpec((Cout, C), lambda b, m: (0, 0)),
                pl.BlockSpec((Cout, 1), lambda b, m: (0, 0)),
            ],
            out_specs=pl.BlockSpec((None, Cout, TM), lambda b, m: (b, 0, m)),
        ),
        compiler_params=pltpu.CompilerParams(
            dimension_semantics=("parallel", "parallel"),
            vmem_limit_bytes=vmem_limit,
        ),
        cost_estimate=cost,
    )(x3, wq, b_col)


def my_upsample(x_nchw, weight, bias, upscale_factor=2,
                compute_dtype=jnp.bfloat16, out_dtype=None):
    """Forward of myUpsample: conv1x1 (C -> C*r*r) followed by PixelShuffle(r).

    x_nchw : [B, C, H, W]
    weight : [C*r*r, C] or PyTorch Conv2d [C*r*r, C, 1, 1]
    bias   : [C*r*r]
    returns: [B, C, H*r, W*r] in out_dtype (defaults to x dtype)
    """
    r = upscale_factor
    B, C, H, W = x_nchw.shape
    Cout = C * r * r
    if weight.ndim == 4:
        assert weight.shape == (Cout, C, 1, 1), weight.shape
        weight = weight.reshape(Cout, C)
    assert weight.shape == (Cout, C), weight.shape
    assert bias.shape == (Cout,), bias.shape
    out_dtype = x_nchw.dtype if out_dtype is None else out_dtype
    M = H * W

    # NCHW is already the transposed-matmul layout; this reshape is a free view.
    x3 = x_nchw.reshape(B, C, M)

    y = conv1x1_transposed_pallas(x3, weight, bias, compute_dtype)  # [B, Cout, M] bf16

    # PixelShuffle: out[b, c, h*r+i, w*r+j] = y[b, c*r*r + i*r + j, h, w].
    # Done by XLA in bf16; the cast back to out_dtype fuses into the transpose.
    # TODO(synk): fuse this rearrange into the kernel's output store (needs a
    # stride-r lane interleave) to save the remaining HBM pass.
    y = y.reshape(B, C, r, r, H, W)
    y = jnp.transpose(y, (0, 1, 4, 2, 5, 3))                        # [B, C, H, r, W, r]
    return y.reshape(B, C, H * r, W * r).astype(out_dtype)


if __name__ == "__main__":
    B, C, H, W = 2, 4, 16, 16
    r = 2
    Cout = C * r * r

    key = jax.random.PRNGKey(0)
    kx, kw, kb = jax.random.split(key, 3)
    x = jax.random.normal(kx, (B, C, H, W), dtype=jnp.float32)
    weight = jax.random.normal(kw, (Cout, C), dtype=jnp.float32) * 0.1
    bias = jax.random.normal(kb, (Cout,), dtype=jnp.float32) * 0.1

    fn = jax.jit(lambda xx, ww, bb: my_upsample(xx, ww, bb, upscale_factor=r))
    out = jax.block_until_ready(fn(x, weight, bias))

    # Pure-JAX f32 reference (conv1x1 + pixel shuffle).  Tolerance covers the
    # bf16 operand cast and bf16 kernel store (f32 accumulation throughout).
    y_ref = jnp.einsum("bchw,oc->bohw", x, weight,
                       preferred_element_type=jnp.float32)
    y_ref = y_ref + bias[None, :, None, None]
    y_ref = y_ref.reshape(B, C, r, r, H, W)
    y_ref = jnp.transpose(y_ref, (0, 1, 4, 2, 5, 3)).reshape(B, C, H * r, W * r)

    assert out.shape == (B, C, H * r, W * r), out.shape
    assert out.dtype == x.dtype, out.dtype
    assert jnp.allclose(out, y_ref, atol=2e-2, rtol=2e-2), (
        float(jnp.max(jnp.abs(out - y_ref))))
    print("KERNEL_OK")
</pallas_src>

<mosaic_0001>
module attributes {stable_mosaic.version = 11 : i64} {
  func.func @_conv1x1_kernel(%arg0: i32, %arg1: i32, %arg2: memref<1x4x256xf32, #tpu.memory_space<vmem>>, %arg3: memref<16x4xbf16, #tpu.memory_space<vmem>>, %arg4: memref<16x1xf32, #tpu.memory_space<vmem>>, %arg5: memref<1x16x256xbf16, #tpu.memory_space<vmem>>) attributes {dimension_semantics = [#tpu.dimension_semantics<parallel>, #tpu.dimension_semantics<parallel>], iteration_bounds = array<i64: 2, 1>, scalar_prefetch = 0 : i64, scratch_operands = 0 : i64, tpu.core_type = #tpu.core_type<tc>, window_params = [{transform_indices = @transform_0, window_bounds = array<i64: 1, 4, 256>}, {pipeline_mode = #tpu.pipeline_mode<synchronous>, transform_indices = @transform_1, window_bounds = array<i64: 16, 4>}, {pipeline_mode = #tpu.pipeline_mode<synchronous>, transform_indices = @transform_2, window_bounds = array<i64: 16, 1>}, {transform_indices = @transform_3, window_bounds = array<i64: 1, 16, 256>}]} {
    %c0 = arith.constant 0 : index
    %c0_0 = arith.constant 0 : index
    %c0_1 = arith.constant 0 : index
    %0 = vector.load %arg2[%c0, %c0_0, %c0_1] : memref<1x4x256xf32, #tpu.memory_space<vmem>>, vector<1x4x256xf32>
    %1 = vector.shape_cast %0 : vector<1x4x256xf32> to vector<4x256xf32>
    %2 = arith.truncf %1 : vector<4x256xf32> to vector<4x256xbf16>
    %c0_2 = arith.constant 0 : index
    %c0_3 = arith.constant 0 : index
    %3 = vector.load %arg3[%c0_2, %c0_3] : memref<16x4xbf16, #tpu.memory_space<vmem>>, vector<16x4xbf16>
    %cst = arith.constant dense<0.000000e+00> : vector<16x256xf32>
    %4 = tpu.matmul %3, %2, %cst {dimension_numbers = #tpu.dot_dimension_numbers<[1], [0], [0], [1], [0, 0, 1, 1], [], []>} : vector<16x4xbf16>, vector<4x256xbf16>, vector<16x256xf32> -> vector<16x256xf32>
    %c0_4 = arith.constant 0 : index
    %c0_5 = arith.constant 0 : index
    %5 = vector.load %arg4[%c0_4, %c0_5] : memref<16x1xf32, #tpu.memory_space<vmem>>, vector<16x1xf32>
    %6 = vector.broadcast %5 : vector<16x1xf32> to vector<16x256xf32>
    %7 = arith.addf %4, %6 : vector<16x256xf32>
    %8 = arith.truncf %7 : vector<16x256xf32> to vector<16x256xbf16>
    %c0_6 = arith.constant 0 : index
    %c0_7 = arith.constant 0 : index
    %c0_8 = arith.constant 0 : index
    %9 = vector.load %arg5[%c0_6, %c0_7, %c0_8] : memref<1x16x256xbf16, #tpu.memory_space<vmem>>, vector<1x16x256xbf16>
    %10 = vector.shape_cast %9 : vector<1x16x256xbf16> to vector<16x256xbf16>
    %11 = vector.shape_cast %8 : vector<16x256xbf16> to vector<1x16x256xbf16>
    tpu.vector_store %arg5[%c0_6, %c0_7, %c0_8], %11 {strides = array<i32>} : memref<1x16x256xbf16, #tpu.memory_space<vmem>>, vector<1x16x256xbf16>,
    return
  }
  func.func @transform_0(%arg0: i32, %arg1: i32) -> (i32, i32, i32) {
    %c0_i32 = arith.constant 0 : i32
    %c0_i32_0 = arith.constant 0 : i32
    return %arg0, %c0_i32, %arg1 : i32, i32, i32
  }
  func.func @transform_1(%arg0: i32, %arg1: i32) -> (i32, i32) {
    %c0_i32 = arith.constant 0 : i32
    %c0_i32_0 = arith.constant 0 : i32
    %c0_i32_1 = arith.constant 0 : i32
    return %c0_i32, %c0_i32_0 : i32, i32
  }
  func.func @transform_2(%arg0: i32, %arg1: i32) -> (i32, i32) {
    %c0_i32 = arith.constant 0 : i32
    %c0_i32_0 = arith.constant 0 : i32
    %c0_i32_1 = arith.constant 0 : i32
    return %c0_i32, %c0_i32_0 : i32, i32
  }
  func.func @transform_3(%arg0: i32, %arg1: i32) -> (i32, i32, i32) {
    %c0_i32 = arith.constant 0 : i32
    %c0_i32_0 = arith.constant 0 : i32
    return %arg0, %c0_i32, %arg1 : i32, i32, i32
  }
}

</mosaic_0001>

<llo_original>
// kernel: _lambda_.1
$region0: #{_lambda_.1}
  #allocation0 [shape = 'u32[]', space=smem, size = 0x4, offset = 0x4, fixed_abs, tag = 'smem constant byte address 0x4 - core index']
  #allocation1 [shape = 'u32[144,128]{1,0:T(1,128)}', space=vmem, size = 0x12000, scoped, tag = 'internal scratch']
  %s0 = inlined_call_operand.vmem [shape: f32[2,4,256], index: 0, kind: input, shape index: {}]
  %s1 = inlined_call_operand.vmem [shape: bf16[16,4], index: 1, kind: input, shape index: {}]
  %s2 = inlined_call_operand.vmem [shape: f32[16,1], index: 2, kind: input, shape index: {}]
  %s3 = inlined_call_operand.vmem [shape: bf16[2,16,256], index: 3, kind: output, shape index: {}]
  %s4 = sld [smem:[#allocation0]]
  $region45: #{_lambda_.1} parent=0
    _
  %s6 = ssub.s32 1, %s4
  %s7 = scalar_select 0, %s6, %s4
  loop: start=0, step=1, limit=4
  $region2: #{_lambda_.1} parent=0 // loop_pre_header
    _
  $region3: #{_lambda_.1} parent=0 // loop_header
    %s9 = sphi 0, %s13
    %p10 = scmp.ge.s32.totalorder %s9, 4
    %s16 = sphi 0, %s28
    %s17 = sphi 0, %s24
    %s18 = sphi 0, %s16
    %s19 = sphi 0, %s17
    %s20 = sphi 0, %s18
    %s21 = sphi 0, %s19
    %s33 = sphi 0, %s35
    %s36 = sphi 0, %s33
    %s37 = sphi 0, %s36
    %s53 = sphi 0, %s37
    %s57 = sphi 0, %s57
    %s59 = sphi 0, %s57
    %s60 = sphi 0, %s59
    %s74 = sphi 0, %s60
    %s78 = sphi 0, %s78
    %s80 = sphi 0, %s78
    %s81 = sphi 0, %s80
    %s95 = sphi 0, %s81
    %s103 = sphi 0, %s105
    %s106 = sphi 0, %s103
    %s107 = sphi 0, %s106
    %s123 = sphi 0, %s107
  $region4: #{_lambda_.1} parent=0 // loop_header_branch
    %12 = sbr.rel (%p10) target = $region8
  $region5: #{_lambda_.1} parent=0 // loop_body
    %s14 = ssub.s32 %s9, 1
    %s15 = ssub.s32 %s9, 2
    %s22 = sadd.s32 1, %s17
    %p23 = scmp.ge.s32.totalorder %s22, 1
    %s24 = scalar_select %p23, 0, %s22
    %s25 = sadd.s32 1, %s16
    %s26 = scalar_select %p23, %s25, %s16
    %p27 = scmp.ge.s32.totalorder %s26, 2
    %s28 = scalar_select %p27, 0, %s26
    %s29 = ssub.s32 %s16, %s28
    %s30 = ssub.s32 %s17, %s24
    %s31 = sor.u32 %s29, %s30
    %p32 = scmp.eq.s32.totalorder %s31, 0
    %s34 = sadd.s32 %s33, 1
    %s35 = scalar_select %p32, %s33, %s34
    %p38 = pneg %p32
    %p39 = scmp.eq.s32.totalorder %s9, 1
    %p40 = por %p38, %p39
    %p41 = scmp.ne.s32.totalorder %s33, %s36
    %p42 = scmp.eq.s32.totalorder %s9, 0
    %p43 = por %p41, %p42
    %p44 = scmp.ne.s32.totalorder %s33, %s36
    %p45 = scmp.eq.s32.totalorder %s14, 1
    %p46 = por %p44, %p45
    %p47 = scmp.ne.s32.totalorder %s36, %s37
    %p48 = scmp.eq.s32.totalorder %s14, 0
    %p49 = por %p47, %p48
    %p50 = scmp.ne.s32.totalorder %s36, %s37
    %p51 = scmp.eq.s32.totalorder %s15, 1
    %p52 = por %p50, %p51
    %p54 = scmp.ne.s32.totalorder %s37, %s53
    %p55 = scmp.eq.s32.totalorder %s15, 0
    %p56 = por %p54, %p55
    %s58 = sadd.s32 %s57, 1
    %p61 = scmp.eq.s32.totalorder %s9, 1
    %p62 = scmp.ne.s32.totalorder %s57, %s59
    %p63 = scmp.eq.s32.totalorder %s9, 0
    %p64 = por %p62, %p63
    %p65 = scmp.ne.s32.totalorder %s57, %s59
    %p66 = scmp.eq.s32.totalorder %s14, 1
    %p67 = por %p65, %p66
    %p68 = scmp.ne.s32.totalorder %s59, %s60
    %p69 = scmp.eq.s32.totalorder %s14, 0
    %p70 = por %p68, %p69
    %p71 = scmp.ne.s32.totalorder %s59, %s60
    %p72 = scmp.eq.s32.totalorder %s15, 1
    %p73 = por %p71, %p72
    %p75 = scmp.ne.s32.totalorder %s60, %s74
    %p76 = scmp.eq.s32.totalorder %s15, 0
    %p77 = por %p75, %p76
    %s79 = sadd.s32 %s78, 1
    %p82 = scmp.eq.s32.totalorder %s9, 1
    %p83 = scmp.ne.s32.totalorder %s78, %s80
    %p84 = scmp.eq.s32.totalorder %s9, 0
    %p85 = por %p83, %p84
    %p86 = scmp.ne.s32.totalorder %s78, %s80
    %p87 = scmp.eq.s32.totalorder %s14, 1
    %p88 = por %p86, %p87
    %p89 = scmp.ne.s32.totalorder %s80, %s81
    %p90 = scmp.eq.s32.totalorder %s14, 0
    %p91 = por %p89, %p90
    %p92 = scmp.ne.s32.totalorder %s80, %s81
    %p93 = scmp.eq.s32.totalorder %s15, 1
    %p94 = por %p92, %p93
    %p96 = scmp.ne.s32.totalorder %s81, %s95
    %p97 = scmp.eq.s32.totalorder %s15, 0
    %p98 = por %p96, %p97
    %s99 = ssub.s32 %s16, %s28
    %s100 = ssub.s32 %s17, %s24
    %s101 = sor.u32 %s99, %s100
    %p102 = scmp.eq.s32.totalorder %s101, 0
    %s104 = sadd.s32 %s103, 1
    %s105 = scalar_select %p102, %s103, %s104
    %p108 = pneg %p102
    %p109 = scmp.eq.s32.totalorder %s9, 1
    %p110 = por %p108, %p109
    %p111 = scmp.ne.s32.totalorder %s103, %s106
    %p112 = scmp.eq.s32.totalorder %s9, 0
    %p113 = por %p111, %p112
    %p114 = scmp.ne.s32.totalorder %s103, %s106
    %p115 = scmp.eq.s32.totalorder %s14, 1
    %p116 = por %p114, %p115
    %p117 = scmp.ne.s32.totalorder %s106, %s107
    %p118 = scmp.eq.s32.totalorder %s14, 0
    %p119 = por %p117, %p118
    %p120 = scmp.ne.s32.totalorder %s106, %s107
    %p121 = scmp.eq.s32.totalorder %s15, 1
    %p122 = por %p120, %p121
    %p124 = scmp.ne.s32.totalorder %s107, %s123
    %p125 = scmp.eq.s32.totalorder %s15, 0
    %p126 = por %p124, %p125
    %p127 = scmp.le.s32.totalorder 1, %s9
    %p128 = scmp.lt.s32.totalorder %s9, 3
    %p129 = pnand %p127, %p128
    %p130 = pneg %p129
    // Predicated region
    $region9: #{_lambda_.1} parent=5 // pred_check
      _
    $region10: #{_lambda_.1} parent=5 // pred_check_branch
      %132 = sbr.rel (%p129) target = $region12
    $region11: #{_lambda_.1} parent=5 // pred_region
      %s133 = ssub.s32 %s9, 1
      // Predicated region
      $region13: #{_lambda_.1} parent=11 // pred_check
        %p134 = pneg %p70
      $region14: #{_lambda_.1} parent=11 // pred_check_branch
        %136 = sbr.rel (%p134) target = $region16
      $region15: #{_lambda_.1} parent=11 // pred_region
        _
      $region16: #{_lambda_.1} parent=11 // pred_fallthru
        _
      // Predicated region
      $region17: #{_lambda_.1} parent=11 // pred_check
        %p137 = pneg %p91
      $region18: #{_lambda_.1} parent=11 // pred_check_branch
        %139 = sbr.rel (%p137) target = $region20
      $region19: #{_lambda_.1} parent=11 // pred_region
        _
      $region20: #{_lambda_.1} parent=11 // pred_fallthru
        _
    $region12: #{_lambda_.1} parent=5 // pred_fallthru
      _
    %p140 = scmp.lt.s32.totalorder %s9, 2
    // Predicated region
    $region21: #{_lambda_.1} parent=5 // pred_check
      %p141 = pneg %p140
    $region22: #{_lambda_.1} parent=5 // pred_check_branch
      %143 = sbr.rel (%p141) target = $region24
    $region23: #{_lambda_.1} parent=5 // pred_region
      // Predicated region
      $region25: #{_lambda_.1} parent=23 // pred_check
        %p144 = pneg %p43
      $region26: #{_lambda_.1} parent=23 // pred_check_branch
        %146 = sbr.rel (%p144) target = $region28
      $region27: #{_lambda_.1} parent=23 // pred_region
        %s147 = smul.u32 2, %s17
        %p148 = scmp.lt.s32.totalorder %s16, 1
        %s149 = scalar_select %p148, %s16, 1
        %p150 = scmp.lt.s32.totalorder %s147, 1
        %s151 = scalar_select %p150, %s147, 1
        %s152 = smul.addr %s149, 2
        %s153 = sadd.s32 %s151, %s152
        %s154 = smul.addr %s153, 4
        %s155 = scalar_lea.vmem %s0, %s154
        %s156 = smul.u32 2, %s17
      $region28: #{_lambda_.1} parent=23 // pred_fallthru
        _
    $region24: #{_lambda_.1} parent=5 // pred_fallthru
      _
    %p157 = scmp.le.s32.totalorder 1, %s9
    %p158 = scmp.lt.s32.totalorder %s9, 3
    %p159 = pnand %p157, %p158
    %p160 = pneg %p159
    // Predicated region
    $region29: #{_lambda_.1} parent=5 // pred_check
      _
    $region30: #{_lambda_.1} parent=5 // pred_check_branch
      %162 = sbr.rel (%p159) target = $region32
    $region31: #{_lambda_.1} parent=5 // pred_region
      %s163 = ssub.s32 %s9, 1
      %s164 = smul.u32 2, %s19
      %p165 = scmp.lt.s32.totalorder %s18, 1
      %s166 = scalar_select %p165, %s18, 1
      %p167 = scmp.lt.s32.totalorder %s164, 1
      %s168 = scalar_select %p167, %s164, 1
      %s169 = smul.addr %s166, 2
      %s170 = sadd.s32 %s168, %s169
      %s171 = smul.addr %s170, 4
      %s172 = scalar_lea.vmem %s0, %s171
      %p173 = pneg %p49
      %p174 = pneg %p46
      %p175 = pneg %p70
      %p176 = pneg %p67
      %p177 = pneg %p91
      %p178 = pneg %p88
      %p179 = pneg %p119
      %p180 = pneg %p116
      %s181 = smul.u32 2, %s19
      %p182 = scmp.lt.s32.totalorder %s18, 1
      %s183 = scalar_select %p182, %s18, 1
      %p184 = scmp.lt.s32.totalorder %s181, 1
      %s185 = scalar_select %p184, %s181, 1
      %s186 = smul.addr %s183, 4
      %s187 = sadd.s32 %s185, %s186
      %s188 = smul.addr %s187, 4
      %s189 = scalar_lea.vmem %s3, %s188
      %s190 = smul.u32 2, %s19
      %p191 = scmp.lt.s32.totalorder %s18, 1
      %s192 = scalar_select %p191, %s18, 1
      %p193 = scmp.lt.s32.totalorder %s190, 1
      %s194 = scalar_select %p193, %s190, 1
      %s195 = smul.addr %s192, 2
      %s196 = sadd.s32 %s194, %s195
      %s197 = smul.addr %s196, 4
      %s198 = scalar_lea.vmem %s0, %s197
      %s199 = smul.u32 2, %s19
      %s200 = smul.u32 2, %s19
      %p201 = scmp.lt.s32.totalorder %s18, 1
      %s202 = scalar_select %p201, %s18, 1
      %p203 = scmp.lt.s32.totalorder %s200, 1
      %s204 = scalar_select %p203, %s200, 1
      %s205 = smul.addr %s202, 4
      %s206 = sadd.s32 %s204, %s205
      %s207 = smul.addr %s206, 4
      %s208 = scalar_lea.vmem %s3, %s207
      %s209 = smul.u32 2, %s19
      %v211 = vld [vmem:[%s198] sm:$0xff]
      %v213 = vcombine.high %v211, %v211
      %v215 = vpack.c.bf16 %v211, %v211
      %v216 = vpack.c.bf16 %v213, %v213
      %v217 = vld [vmem:[%s1] sm:$0xf]
      %v218 = vld [vmem:[%s1 + $0x4] sm:$0xf]
      %v219 = vld [vmem:[%s2] sm:$0xff]
      %v220 = vld [vmem:[%s2 + $0x8] sm:$0xff]
      %222 = vset.pattern.permute.xlu0 0
      %223 = vperm.xlu0 %222, %v219
      %v224 = vpop.permute.xlu0 %223
      %227 = vset.pattern.permute.xlu0 0
      %228 = vperm.xlu0 %227, %v220
      %v229 = vpop.permute.xlu0 %228
      %v233 = vunpack.c.l.b16 %v217
      %v234 = vunpack.c.l.b16 %v218
      %v235 = vpack.c.b16 %v234, %v233
      %vm236 = vcmask 31744
      %v238 = vsel %vm236, %v235, 0
      %vm240 = vcmask 1041408
      %v242 = vsel %vm240, %v215, 0
      %v245 = vsel %vm240, %v216, 0
      %247 = vmatprep.subr.bf16.mxu0 %v245
      %248 = vmatpush1.bf16.msra.mxu0 %v242
      %249 = vmatprep.subr.bf16.mxu0 0
      %250 = vmatpush1.bf16.msra.mxu0 0
      %251 = vmatprep.subr.bf16.mxu0 0
      %252 = vmatpush1.bf16.msra.mxu0 0
      %253 = vmatprep.subr.bf16.mxu0 0
      %254 = vmatpush1.bf16.msra.mxu0 0
      %255 = vmatprep.subr.bf16.mxu0 0
      %256 = vmatpush1.bf16.msra.mxu0 0
      %257 = vmatprep.subr.bf16.mxu0 0
      %258 = vmatpush1.bf16.msra.mxu0 0
      %259 = vmatprep.subr.bf16.mxu0 0
      %260 = vmatpush1.bf16.msra.mxu0 0
      %261 = vmatprep.subr.bf16.mxu0 0
      %262 = vmatpush1.bf16.msra.mxu0 0
      %263 = vmatprep.subr.bf16.mxu0 0
      %264 = vmatpush1.bf16.msra.mxu0 0
      %265 = vmatprep.subr.bf16.mxu0 0
      %266 = vmatpush1.bf16.msra.mxu0 0
      %267 = vmatprep.subr.bf16.mxu0 0
      %268 = vmatpush1.bf16.msra.mxu0 0
      %269 = vmatprep.subr.bf16.mxu0 0
      %270 = vmatpush1.bf16.msra.mxu0 0
      %271 = vmatprep.subr.bf16.mxu0 0
      %272 = vmatpush1.bf16.msra.mxu0 0
      %273 = vmatprep.subr.bf16.mxu0 0
      %274 = vmatpush1.bf16.msra.mxu0 0
      %275 = vmatprep.subr.bf16.mxu0 0
      %276 = vmatpush1.bf16.msra.mxu0 0
      %277 = vmatprep.subr.bf16.mxu0 0
      %278 = vmatpush1.bf16.msra.mxu0 0
      %279 = vmatprep.mubr.bf16.mxu0 0
      %280 = vmatmul.mubr.bf16.gmra.mrb[0].mxu0 %v238
      %v281 = vpop.f32.mrb[0].mxu0
      %v282 = vadd.f32 %v224, %v281
      %v283 = vpop.f32.mrb[0].mxu0
      %v284 = vadd.f32 %v224, %v283
      %v285 = vpop.f32.mrb[0].mxu0
      %v286 = vadd.f32 %v229, %v285
      %v287 = vpop.f32.mrb[0].mxu0
      %v288 = vadd.f32 %v229, %v287
      %289 = vdwg.mxu0
      %v290 = vpack.c.bf16 %v286, %v282
      %v291 = vpack.c.bf16 %v288, %v284
      %v294 = vunpack.c.l.b16 %v290
      %v295 = vunpack.c.l.b16 %v291
      %v296 = vunpack.c.h.b16 %v290
      %v297 = vunpack.c.h.b16 %v291
      %v298 = vpack.c.b16 %v295, %v294
      %v299 = vpack.c.b16 %v297, %v296
      %302 = vst [vmem:[%s208] sm:$0xff] %v298
      %303 = vst [vmem:[%s208 + $0x8] sm:$0xff] %v299
      %s304 = smul.u32 2, %s19
      %p305 = scmp.lt.s32.totalorder %s18, 1
      %s306 = scalar_select %p305, %s18, 1
      %p307 = scmp.lt.s32.totalorder %s304, 1
      %s308 = scalar_select %p307, %s304, 1
      %s309 = smul.addr %s306, 4
      %s310 = sadd.s32 %s308, %s309
      %s311 = smul.addr %s310, 4
      %s312 = scalar_lea.vmem %s3, %s311
      // Predicated region
      $region33: #{_lambda_.1} parent=31 // pred_check
        %p313 = pneg %p116
      $region34: #{_lambda_.1} parent=31 // pred_check_branch
        %315 = sbr.rel (%p313) target = $region36
      $region35: #{_lambda_.1} parent=31 // pred_region
        %s316 = smul.u32 2, %s19
      $region36: #{_lambda_.1} parent=31 // pred_fallthru
        _
    $region32: #{_lambda_.1} parent=5 // pred_fallthru
      _
    %p317 = scmp.le.s32.totalorder 2, %s9
    // Predicated region
    $region37: #{_lambda_.1} parent=5 // pred_check
      %p318 = pneg %p317
    $region38: #{_lambda_.1} parent=5 // pred_check_branch
      %320 = sbr.rel (%p318) target = $region40
    $region39: #{_lambda_.1} parent=5 // pred_region
      %s321 = ssub.s32 %s9, 2
      // Predicated region
      $region41: #{_lambda_.1} parent=39 // pred_check
        %p322 = pneg %p122
      $region42: #{_lambda_.1} parent=39 // pred_check_branch
        %324 = sbr.rel (%p322) target = $region44
      $region43: #{_lambda_.1} parent=39 // pred_region
        %s325 = smul.u32 2, %s21
        %p326 = scmp.lt.s32.totalorder %s20, 1
        %s327 = scalar_select %p326, %s20, 1
        %p328 = scmp.lt.s32.totalorder %s325, 1
        %s329 = scalar_select %p328, %s325, 1
        %s330 = smul.addr %s327, 4
        %s331 = sadd.s32 %s329, %s330
        %s332 = smul.addr %s331, 4
        %s333 = scalar_lea.vmem %s3, %s332
      $region44: #{_lambda_.1} parent=39 // pred_fallthru
        _
    $region40: #{_lambda_.1} parent=5 // pred_fallthru
      _
  $region6: #{_lambda_.1} parent=0 // loop_footer
    %s13 = sadd.s32 1, %s9
  $region7: #{_lambda_.1} parent=0 // loop_footer_branch
    %8 = sbr.rel target = $region3
  $region8: #{_lambda_.1} parent=0 // loop_exit
    _

</llo_original>
